<compile_context>
chip_gen: v6e
topology: v6e:2x2x1
jax: 0.10.0
libtpu: 0.0.40
codegen_flags: <defaults>
</compile_context>

<pallas_src>
import functools
import math

import jax
import jax.numpy as jnp
from jax.experimental import pallas as pl
from jax.experimental.pallas import tpu as pltpu


def _pick_tile(total, target, quantum):
    """Largest divisor of `total` that is <= target and a multiple of `quantum`.

    Falls back to the full extent (which always satisfies the TPU (8,128) block
    rule) when no such divisor exists or when `total` is already small.
    """
    if total <= target:
        return total
    t = (min(target, total) // quantum) * quantum
    while t >= quantum:
        if total % t == 0:
            return t
        t -= quantum
    return total


# ---------------------------------------------------------------------------
# LayerNorm kernel
# ---------------------------------------------------------------------------
def layer_norm_kernel(x_ref, g_ref, b_ref, o_ref, *, eps):
    x = x_ref[...].astype(jnp.float32)
    mu = jnp.mean(x, axis=-1, keepdims=True)
    xc = x - mu
    var = jnp.mean(xc * xc, axis=-1, keepdims=True)
    y = xc * jax.lax.rsqrt(var + eps)
    o_ref[...] = (y * g_ref[...] + b_ref[...]).astype(o_ref.dtype)


def layer_norm(x, gamma, beta, *, eps=1e-5, tm=256):
    B, S, D = x.shape
    M = B * S
    tm = _pick_tile(M, tm, 8)
    out = pl.pallas_call(
        functools.partial(layer_norm_kernel, eps=eps),
        out_shape=jax.ShapeDtypeStruct((M, D), x.dtype),
        grid_spec=pltpu.PrefetchScalarGridSpec(
            num_scalar_prefetch=0,
            grid=(M // tm,),
            in_specs=[pl.BlockSpec((tm, D), lambda i: (i, 0)),
                      pl.BlockSpec((1, D), lambda i: (0, 0)),
                      pl.BlockSpec((1, D), lambda i: (0, 0))],
            out_specs=pl.BlockSpec((tm, D), lambda i: (i, 0))),
        compiler_params=pltpu.CompilerParams(dimension_semantics=("parallel",)),
    )(x.reshape(M, D),
      gamma.reshape(1, D).astype(jnp.float32),
      beta.reshape(1, D).astype(jnp.float32))
    return out.reshape(B, S, D)


# ---------------------------------------------------------------------------
# Multi-head attention kernel (one batch element per grid step)
# ---------------------------------------------------------------------------
def mha_kernel(x_ref, mask_ref, wq_ref, wk_ref, wv_ref, wo_ref, o_ref,
               *, num_heads, dropout_p, training, seed):
    x = x_ref[0].astype(jnp.float32)        # (S, D)
    mask = mask_ref[0]                      # (S, S), float; 0 means "masked out"
    S, D = x.shape
    d_k = D // num_heads
    scale = 1.0 / math.sqrt(d_k)

    q = jnp.dot(x, wq_ref[...].astype(jnp.float32), preferred_element_type=jnp.float32)
    k = jnp.dot(x, wk_ref[...].astype(jnp.float32), preferred_element_type=jnp.float32)
    v = jnp.dot(x, wv_ref[...].astype(jnp.float32), preferred_element_type=jnp.float32)

    out = jnp.zeros((S, D), jnp.float32)
    for hi in range(num_heads):             # static loop over heads
        lo, hi_end = hi * d_k, (hi + 1) * d_k
        qh, kh, vh = q[:, lo:hi_end], k[:, lo:hi_end], v[:, lo:hi_end]
        scores = jnp.dot(qh, kh.T, preferred_element_type=jnp.float32) * scale
        scores = jnp.where(mask == 0.0, -1e9, scores)
        m = jnp.max(scores, axis=-1, keepdims=True)
        e = jnp.exp(scores - m)
        attn = e / jnp.sum(e, axis=-1, keepdims=True)
        if training and dropout_p > 0.0:
            # TODO(synk): attention dropout uses the TPU PRNG, not PyTorch's stream.
            pltpu.prng_seed(seed + pl.program_id(0) * num_heads + hi)
            bits = pltpu.bitcast(pltpu.prng_random_bits(attn.shape), jnp.uint32)
            thr = jnp.uint32(min(int((1.0 - dropout_p) * 2 ** 32), 2 ** 32 - 1))
            attn = jnp.where(bits < thr, attn * (1.0 / (1.0 - dropout_p)), 0.0)
        head = jnp.dot(attn, vh, preferred_element_type=jnp.float32)      # (S, d_k)
        # accumulating head @ Wo[rows of this head] == concat(heads) @ Wo
        out = out + jnp.dot(head, wo_ref[lo:hi_end, :].astype(jnp.float32),
                            preferred_element_type=jnp.float32)
    o_ref[0] = out.astype(o_ref.dtype)


def multi_head_attention(x, mask, wq, wk, wv, wo, *, num_heads,
                         dropout_p=0.1, training=False, seed=0):
    """x: (B, S, D); mask: (S, S) or (B, S, S); weights: (D, D) each."""
    B, S, D = x.shape
    mask = jnp.asarray(mask, jnp.float32)
    if mask.ndim == 2:
        mask = jnp.broadcast_to(mask[None], (B, S, S))
    # TODO(synk): per-batch full-sequence attention is fine for short sequences;
    # long sequences need a flash-style (q-tile, kv-tile) grid.
    kernel = functools.partial(mha_kernel, num_heads=num_heads,
                               dropout_p=dropout_p, training=training, seed=seed)
    return pl.pallas_call(
        kernel,
        out_shape=jax.ShapeDtypeStruct((B, S, D), x.dtype),
        grid_spec=pltpu.PrefetchScalarGridSpec(
            num_scalar_prefetch=0,
            grid=(B,),
            in_specs=[pl.BlockSpec((1, S, D), lambda b: (b, 0, 0)),
                      pl.BlockSpec((1, S, S), lambda b: (b, 0, 0)),
                      pl.BlockSpec((D, D), lambda b: (0, 0)),
                      pl.BlockSpec((D, D), lambda b: (0, 0)),
                      pl.BlockSpec((D, D), lambda b: (0, 0)),
                      pl.BlockSpec((D, D), lambda b: (0, 0))],
            out_specs=pl.BlockSpec((1, S, D), lambda b: (b, 0, 0))),
        compiler_params=pltpu.CompilerParams(dimension_semantics=("parallel",)),
    )(x, mask, wq, wk, wv, wo)


# ---------------------------------------------------------------------------
# FeedForward kernel: (row-tile, d_ff-tile) grid with f32 VMEM accumulator
# ---------------------------------------------------------------------------
def ffn_kernel(x_ref, w1_ref, b1_ref, w2_ref, b2_ref, o_ref, acc_ref,
               *, dropout_p, training, seed):
    f = pl.program_id(1)
    nf = pl.num_programs(1)

    @pl.when(f == 0)
    def _init():
        acc_ref[...] = jnp.zeros_like(acc_ref)

    x = x_ref[...].astype(w1_ref.dtype)                         # bf16 MXU operand
    h = jnp.dot(x, w1_ref[...], preferred_element_type=jnp.float32)   # (tm, tf) f32
    h = h + b1_ref[...]
    h = jnp.maximum(h, 0.0)

    if training and dropout_p > 0.0:
        # TODO(synk): TPU PRNG stream, not bit-exact with torch.nn.Dropout.
        pltpu.prng_seed(seed + pl.program_id(0) * nf + f)
        bits = pltpu.bitcast(pltpu.prng_random_bits(h.shape), jnp.uint32)
        thr = jnp.uint32(min(int((1.0 - dropout_p) * 2 ** 32), 2 ** 32 - 1))
        h = jnp.where(bits < thr, h * (1.0 / (1.0 - dropout_p)), 0.0)

    acc_ref[...] += jnp.dot(h.astype(w2_ref.dtype), w2_ref[...],
                            preferred_element_type=jnp.float32)

    @pl.when(f == nf - 1)
    def _finalize():
        o_ref[...] = (acc_ref[...] + b2_ref[...]).astype(o_ref.dtype)


def feed_forward(x, w1, b1, w2, b2, *, dropout_p=0.1, training=False, seed=0,
                 tm=256, tf=512, mxu_dtype=jnp.bfloat16):
    """x: (B, S, D); w1: (D, d_ff); w2: (d_ff, D). Returns (B, S, D)."""
    B, S, D = x.shape
    d_ff = w1.shape[1]
    M = B * S
    tm = _pick_tile(M, tm, 8)       # NOTE: prefer tm<=128 / smaller tf on v5e.
    tf = _pick_tile(d_ff, tf, 128)

    x2 = x.reshape(M, D)
    w1c = w1.astype(mxu_dtype)
    w2c = w2.astype(mxu_dtype)
    b1r = b1.reshape(1, d_ff).astype(jnp.float32)
    b2r = b2.reshape(1, D).astype(jnp.float32)

    wbytes = jnp.dtype(mxu_dtype).itemsize
    xbytes = jnp.dtype(x.dtype).itemsize
    # double-buffered inputs + double-buffered output + f32 accumulator, 2x headroom
    est = 2 * (tm * D * xbytes + D * tf * wbytes + tf * 4 + tf * D * wbytes + D * 4)
    est += 2 * tm * D * xbytes + tm * D * 4
    vmem_limit = int(min(120 * 1024 * 1024, max(2 * est, 16 * 1024 * 1024)))

    cost = pl.CostEstimate(
        flops=4 * M * D * d_ff,
        transcendentals=0,
        bytes_accessed=(2 * M * D * xbytes + 2 * D * d_ff * wbytes + (d_ff + D) * 4))

    kernel = functools.partial(ffn_kernel, dropout_p=dropout_p,
                               training=training, seed=seed)

    out = pl.pallas_call(
        kernel,
        out_shape=jax.ShapeDtypeStruct((M, D), x.dtype),
        grid_spec=pltpu.PrefetchScalarGridSpec(
            num_scalar_prefetch=0,
            grid=(M // tm, d_ff // tf),
            in_specs=[
                pl.BlockSpec((tm, D), lambda i, f: (i, 0)),    # x rows
                pl.BlockSpec((D, tf), lambda i, f: (0, f)),    # W1 chunk
                pl.BlockSpec((1, tf), lambda i, f: (0, f)),    # b1 chunk
                pl.BlockSpec((tf, D), lambda i, f: (f, 0)),    # W2 chunk
                pl.BlockSpec((1, D), lambda i, f: (0, 0)),     # b2
            ],
            out_specs=pl.BlockSpec((tm, D), lambda i, f: (i, 0)),
            scratch_shapes=[pltpu.VMEM((tm, D), jnp.float32)],
        ),
        compiler_params=pltpu.CompilerParams(
            dimension_semantics=("parallel", "arbitrary"),
            vmem_limit_bytes=vmem_limit),
        cost_estimate=cost,
    )(x2, w1c, b1r, w2c, b2r)

    return out.reshape(B, S, D)


# ---------------------------------------------------------------------------
# Encoder block wrapper
# ---------------------------------------------------------------------------
def _residual_dropout(x, p, training, seed):
    # TODO(synk): residual-path dropout uses jax.random, not PyTorch's RNG stream.
    if not training or p <= 0.0:
        return x
    keep = jax.random.bernoulli(jax.random.PRNGKey(seed), 1.0 - p, x.shape)
    return jnp.where(keep, x / (1.0 - p), jnp.zeros_like(x))


def encoder_block(x, params, src_mask, *, num_heads, dropout_p=0.1,
                  training=False, seed=0):
    """Pre-LN encoder block matching the PyTorch EncoderBlock forward."""
    h = layer_norm(x, params["ln1_g"], params["ln1_b"])
    attn = multi_head_attention(h, src_mask, params["wq"], params["wk"],
                                params["wv"], params["wo"], num_heads=num_heads,
                                dropout_p=dropout_p, training=training, seed=seed)
    x = x + _residual_dropout(attn, dropout_p, training, seed + 101)

    h = layer_norm(x, params["ln2_g"], params["ln2_b"])
    ff = feed_forward(h, params["w1"], params["b1"], params["w2"], params["b2"],
                      dropout_p=dropout_p, training=training, seed=seed + 202)
    x = x + _residual_dropout(ff, dropout_p, training, seed + 303)
    return x


# ---------------------------------------------------------------------------
# Parameters + pure-JAX reference
# ---------------------------------------------------------------------------
def init_params(key, d_model, d_ff):
    ks = jax.random.split(key, 12)
    bd = 1.0 / math.sqrt(d_model)
    bf = 1.0 / math.sqrt(d_ff)

    def u(k, shape, b):
        return jax.random.uniform(k, shape, jnp.float32, -b, b)

    return dict(
        wq=u(ks[0], (d_model, d_model), bd),
        wk=u(ks[1], (d_model, d_model), bd),
        wv=u(ks[2], (d_model, d_model), bd),
        wo=u(ks[3], (d_model, d_model), bd),
        w1=u(ks[4], (d_model, d_ff), bd),
        b1=u(ks[5], (d_ff,), bd),
        w2=u(ks[6], (d_ff, d_model), bf),
        b2=u(ks[7], (d_model,), bf),
        ln1_g=1.0 + 0.1 * jax.random.normal(ks[8], (d_model,), jnp.float32),
        ln1_b=0.1 * jax.random.normal(ks[9], (d_model,), jnp.float32),
        ln2_g=1.0 + 0.1 * jax.random.normal(ks[10], (d_model,), jnp.float32),
        ln2_b=0.1 * jax.random.normal(ks[11], (d_model,), jnp.float32),
    )


def encoder_block_ref(x, params, src_mask, *, num_heads):
    def ln(v, g, b, eps=1e-5):
        mu = jnp.mean(v, axis=-1, keepdims=True)
        var = jnp.mean((v - mu) ** 2, axis=-1, keepdims=True)
        return (v - mu) / jnp.sqrt(var + eps) * g + b

    def mha(v, mask):
        B, S, D = v.shape
        d_k = D // num_heads
        q = (v @ params["wq"]).reshape(B, S, num_heads, d_k).transpose(0, 2, 1, 3)
        k = (v @ params["wk"]).reshape(B, S, num_heads, d_k).transpose(0, 2, 1, 3)
        val = (v @ params["wv"]).reshape(B, S, num_heads, d_k).transpose(0, 2, 1, 3)
        s = (q @ jnp.swapaxes(k, -2, -1)) / math.sqrt(d_k)
        s = jnp.where(mask[:, None, :, :] == 0, -1e9, s)
        a = jax.nn.softmax(s, axis=-1)
        o = (a @ val).transpose(0, 2, 1, 3).reshape(B, S, D)
        return o @ params["wo"]

    def ffn(v):
        h = jnp.maximum(v @ params["w1"] + params["b1"], 0.0)
        return h @ params["w2"] + params["b2"]

    x = x + mha(ln(x, params["ln1_g"], params["ln1_b"]), src_mask)
    x = x + ffn(ln(x, params["ln2_g"], params["ln2_b"]))
    return x


if __name__ == "__main__":
    key = jax.random.PRNGKey(0)
    kx, kp = jax.random.split(key)

    batch, seq, d_model, d_ff, heads = 2, 8, 32, 64, 4
    x = jax.random.normal(kx, (batch, seq, d_model), jnp.float32)
    params = init_params(kp, d_model, d_ff)
    src_mask = jnp.broadcast_to(jnp.tril(jnp.ones((seq, seq), jnp.float32)),
                                (batch, seq, seq))

    # Eval mode: all dropouts are identity -> deterministic & checkable.
    out = encoder_block(x, params, src_mask, num_heads=heads,
                        dropout_p=0.1, training=False)
    out = jax.block_until_ready(out)

    ref = encoder_block_ref(x, params, src_mask, num_heads=heads)
    assert out.shape == (batch, seq, d_model)
    # bf16 MXU operands in the FFN -> modest tolerance vs. the f32 reference.
    assert jnp.allclose(out, ref, atol=2.5e-2, rtol=2.5e-2), (
        f"max abs err {float(jnp.max(jnp.abs(out - ref)))}")

    print("KERNEL_OK")
</pallas_src>

<mosaic_0001>
module attributes {stable_mosaic.version = 11 : i64} {
  func.func @layer_norm_kernel(%arg0: i32, %arg1: memref<16x32xf32, #tpu.memory_space<vmem>>, %arg2: memref<1x32xf32, #tpu.memory_space<vmem>>, %arg3: memref<1x32xf32, #tpu.memory_space<vmem>>, %arg4: memref<16x32xf32, #tpu.memory_space<vmem>>) attributes {dimension_semantics = [#tpu.dimension_semantics<parallel>], iteration_bounds = array<i64: 1>, scalar_prefetch = 0 : i64, scratch_operands = 0 : i64, tpu.core_type = #tpu.core_type<tc>, window_params = [{transform_indices = @transform_0, window_bounds = array<i64: 16, 32>}, {pipeline_mode = #tpu.pipeline_mode<synchronous>, transform_indices = @transform_1, window_bounds = array<i64: 1, 32>}, {pipeline_mode = #tpu.pipeline_mode<synchronous>, transform_indices = @transform_2, window_bounds = array<i64: 1, 32>}, {transform_indices = @transform_3, window_bounds = array<i64: 16, 32>}]} {
    %c0 = arith.constant 0 : index
    %c0_0 = arith.constant 0 : index
    %0 = vector.load %arg1[%c0, %c0_0] : memref<16x32xf32, #tpu.memory_space<vmem>>, vector<16x32xf32>
    %cst = arith.constant dense<0.000000e+00> : vector<16xf32>
    %1 = vector.multi_reduction <add>, %0, %cst [1] : vector<16x32xf32> to vector<16xf32>
    %2 = vector.shape_cast %1 : vector<16xf32> to vector<16x1xf32>
    %cst_1 = arith.constant 3.200000e+01 : f32
    %3 = vector.broadcast %cst_1 : f32 to vector<16x1xf32>
    %4 = arith.divf %2, %3 : vector<16x1xf32>
    %5 = vector.broadcast %4 : vector<16x1xf32> to vector<16x32xf32>
    %6 = arith.subf %0, %5 : vector<16x32xf32>
    %7 = arith.mulf %6, %6 : vector<16x32xf32>
    %cst_2 = arith.constant dense<0.000000e+00> : vector<16xf32>
    %8 = vector.multi_reduction <add>, %7, %cst_2 [1] : vector<16x32xf32> to vector<16xf32>
    %9 = vector.shape_cast %8 : vector<16xf32> to vector<16x1xf32>
    %cst_3 = arith.constant 3.200000e+01 : f32
    %10 = vector.broadcast %cst_3 : f32 to vector<16x1xf32>
    %11 = arith.divf %9, %10 : vector<16x1xf32>
    %cst_4 = arith.constant 9.99999974E-6 : f32
    %12 = vector.broadcast %cst_4 : f32 to vector<16x1xf32>
    %13 = arith.addf %11, %12 : vector<16x1xf32>
    %14 = math.rsqrt %13 : vector<16x1xf32>
    %15 = vector.broadcast %14 : vector<16x1xf32> to vector<16x32xf32>
    %16 = arith.mulf %6, %15 : vector<16x32xf32>
    %c0_5 = arith.constant 0 : index
    %c0_6 = arith.constant 0 : index
    %17 = vector.load %arg2[%c0_5, %c0_6] : memref<1x32xf32, #tpu.memory_space<vmem>>, vector<1x32xf32>
    %18 = vector.broadcast %17 : vector<1x32xf32> to vector<16x32xf32>
    %19 = arith.mulf %16, %18 : vector<16x32xf32>
    %c0_7 = arith.constant 0 : index
    %c0_8 = arith.constant 0 : index
    %20 = vector.load %arg3[%c0_7, %c0_8] : memref<1x32xf32, #tpu.memory_space<vmem>>, vector<1x32xf32>
    %21 = vector.broadcast %20 : vector<1x32xf32> to vector<16x32xf32>
    %22 = arith.addf %19, %21 : vector<16x32xf32>
    %c0_9 = arith.constant 0 : index
    %c0_10 = arith.constant 0 : index
    %23 = vector.load %arg4[%c0_9, %c0_10] : memref<16x32xf32, #tpu.memory_space<vmem>>, vector<16x32xf32>
    tpu.vector_store %arg4[%c0_9, %c0_10], %22 {strides = array<i32>} : memref<16x32xf32, #tpu.memory_space<vmem>>, vector<16x32xf32>,
    return
  }
  func.func @transform_0(%arg0: i32) -> (i32, i32) {
    %c0_i32 = arith.constant 0 : i32
    %c0_i32_0 = arith.constant 0 : i32
    return %arg0, %c0_i32 : i32, i32
  }
  func.func @transform_1(%arg0: i32) -> (i32, i32) {
    %c0_i32 = arith.constant 0 : i32
    %c0_i32_0 = arith.constant 0 : i32
    %c0_i32_1 = arith.constant 0 : i32
    return %c0_i32, %c0_i32_0 : i32, i32
  }
  func.func @transform_2(%arg0: i32) -> (i32, i32) {
    %c0_i32 = arith.constant 0 : i32
    %c0_i32_0 = arith.constant 0 : i32
    %c0_i32_1 = arith.constant 0 : i32
    return %c0_i32, %c0_i32_0 : i32, i32
  }
  func.func @transform_3(%arg0: i32) -> (i32, i32) {
    %c0_i32 = arith.constant 0 : i32
    %c0_i32_0 = arith.constant 0 : i32
    return %arg0, %c0_i32 : i32, i32
  }
}

</mosaic_0001>

<llo_original>
// kernel: tpu_custom_call.1
$region0: #{tpu_custom_call.1}
  #allocation0 [shape = 'u32[]', space=smem, size = 0x4, offset = 0x4, fixed_abs, tag = 'smem constant byte address 0x4 - core index']
  #allocation1 [shape = 'u32[144,128]{1,0:T(1,128)}', space=vmem, size = 0x12000, scoped, tag = 'internal scratch']
  %s0 = inlined_call_operand.hbm [shape: f32[16,32], index: 0, kind: input, shape index: {}]
  %s1 = inlined_call_operand.vmem [shape: f32[1,32], index: 1, kind: input, shape index: {}]
  %s2 = inlined_call_operand.vmem [shape: f32[1,32], index: 2, kind: input, shape index: {}]
  %s3 = inlined_call_operand.hbm [shape: f32[16,32], index: 3, kind: output, shape index: {}]
  %s4 = sld [smem:[#allocation0]]
  $region26: #{tpu_custom_call.1} parent=0
    _
  %s6 = ssub.s32 1, %s4
  %s7 = scalar_select 0, %s6, %s4
  $region1: #{tpu_custom_call.1} parent=0
    #allocation2 [shape = 'u8[8192]{0}', space=vmem, size = 0x2000, scoped, tag = 'input window, operand 0, single buffered']
    #allocation3 [shape = 's32[1]{0}', space=sflag, size = 0x4, scoped, tag = 'scoped memory for tpu_custom_call.1']
    #allocation4 [shape = 's32[1]{0}', space=sflag, size = 0x4, scoped, tag = 'scoped memory for tpu_custom_call.1']
    #allocation5 [shape = 'u8[8192]{0}', space=vmem, size = 0x2000, scoped, tag = 'output window, operand 0, single buffered']
    %8 = vsyncpa [#allocation3], 0
    %9 = vsyncpa [#allocation4], 0
    // Predicated region
    $region2: #{tpu_custom_call.1} parent=1 // pred_check
      _
    $region3: #{tpu_custom_call.1} parent=1 // pred_check_branch
      %11 = sbr.rel (0) target = $region5
    $region4: #{tpu_custom_call.1} parent=1 // pred_region
      %s13 = ssub.s32 256, 256
      %14 = vsyncadd [#allocation3], %s13
      %s15 = sshll.u32 [#allocation2], 4
      %s16 = int_to_ptr.vmem [resolvable:$true] %s15
      %21 = dma.hbm_to_vmem [thread:$0]  %s0, 256, %s16, [#allocation3], 128, 128, 8
    $region5: #{tpu_custom_call.1} parent=1 // pred_fallthru
      _
    // Predicated region
    $region6: #{tpu_custom_call.1} parent=1 // pred_check
      _
    $region7: #{tpu_custom_call.1} parent=1 // pred_check_branch
      %23 = sbr.rel (0) target = $region9
    $region8: #{tpu_custom_call.1} parent=1 // pred_region
      _
    $region9: #{tpu_custom_call.1} parent=1 // pred_fallthru
      _
    // Predicated region
    $region10: #{tpu_custom_call.1} parent=1 // pred_check
      _
    $region11: #{tpu_custom_call.1} parent=1 // pred_check_branch
      %25 = sbr.rel (0) target = $region13
    $region12: #{tpu_custom_call.1} parent=1 // pred_region
      _
    $region13: #{tpu_custom_call.1} parent=1 // pred_fallthru
      _
    // Predicated region
    $region14: #{tpu_custom_call.1} parent=1 // pred_check
      _
    $region15: #{tpu_custom_call.1} parent=1 // pred_check_branch
      %27 = sbr.rel (0) target = $region17
    $region16: #{tpu_custom_call.1} parent=1 // pred_region
      %28 = dma.done [#allocation3], 256
    $region17: #{tpu_custom_call.1} parent=1 // pred_fallthru
      _
    %v29 = vld [vmem:[#allocation2] sm:$0xff]
    %v30 = vld [vmem:[#allocation2 + $0x8] sm:$0xff]
    %vm31 = vcmask 261120
    %v32 = vsel %vm31, %v29, 0.0
    %33 = vadd.xlane.f32.xlu0 %v32
    %v34 = vpop.xlane.xlu0 %33
    %v35 = vsel %vm31, %v30, 0.0
    %36 = vadd.xlane.f32.xlu0 %v35
    %v37 = vpop.xlane.xlu0 %36
    %v38 = vrcp.pop 32.0
    %v39 = vmul.f32 %v34, %v38
    %v40 = vmul.f32 %v37, %v38
    %v41 = vsub.f32 %v29, %v39
    %v42 = vsub.f32 %v30, %v40
    %v43 = vmul.f32 %v41, %v41
    %v44 = vmul.f32 %v42, %v42
    %v45 = vsel %vm31, %v43, 0.0
    %46 = vadd.xlane.f32.xlu0 %v45
    %v47 = vpop.xlane.xlu0 %46
    %v48 = vsel %vm31, %v44, 0.0
    %49 = vadd.xlane.f32.xlu0 %v48
    %v50 = vpop.xlane.xlu0 %49
    %v51 = vmul.f32 %v47, %v38
    %v52 = vmul.f32 %v50, %v38
    %v53 = vadd.f32 %v51, 1e-05
    %v54 = vadd.f32 %v52, 1e-05
    %v55 = vrsqrt.pop %v53
    %v56 = vrsqrt.pop %v54
    %v57 = vmul.f32 %v41, %v55
    %v58 = vmul.f32 %v42, %v56
    %v59 = vld [vmem:[%s1] sm:$0x1]
    %v61 = vlaneseq
    %v62 = vshrl.u32 %v61, 7
    %v63 = vsub.s32 0, %v62
    %v64 = vrot.slane %v59, %v63
    %v66 = vmul.f32 %v57, %v64
    %v67 = vmul.f32 %v58, %v64
    %v68 = vld [vmem:[%s2] sm:$0x1]
    %v70 = vlaneseq
    %v71 = vshrl.u32 %v70, 7
    %v72 = vsub.s32 0, %v71
    %v73 = vrot.slane %v68, %v72
    %v75 = vadd.f32 %v66, %v73
    %v76 = vadd.f32 %v67, %v73
    %77 = vst.msk [vmem:[#allocation5] sm:$0xff] %vm31, %v75
    %78 = vst.msk [vmem:[#allocation5 + $0x8] sm:$0xff] %vm31, %v76
    // Predicated region
    $region18: #{tpu_custom_call.1} parent=1 // pred_check
      _
    $region19: #{tpu_custom_call.1} parent=1 // pred_check_branch
      %80 = sbr.rel (0) target = $region21
    $region20: #{tpu_custom_call.1} parent=1 // pred_region
      %s82 = ssub.s32 256, 256
      %83 = vsyncadd [#allocation4], %s82
      %s84 = sshll.u32 [#allocation5], 4
      %s85 = int_to_ptr.vmem [resolvable:$true] %s84
      %90 = dma.vmem_to_hbm [thread:$0]  %s85, 256, %s3, [#allocation4], 128, 128, 8
    $region21: #{tpu_custom_call.1} parent=1 // pred_fallthru
      _
    // Predicated region
    $region22: #{tpu_custom_call.1} parent=1 // pred_check
      _
    $region23: #{tpu_custom_call.1} parent=1 // pred_check_branch
      %92 = sbr.rel (0) target = $region25
    $region24: #{tpu_custom_call.1} parent=1 // pred_region
      %93 = dma.done [#allocation4], 256
    $region25: #{tpu_custom_call.1} parent=1 // pred_fallthru
      _
    %94 = vsyncpa [#allocation3], 1
    %95 = vsyncpa [#allocation4], 1

</llo_original>
